<compile_context>
chip_gen: v7x
topology: tpu7x:2x2x1
jax: 0.10.0
libtpu: 0.0.40
codegen_flags: <defaults>
</compile_context>

<pallas_src>
import functools

import jax
import jax.numpy as jnp
from jax.experimental import pallas as pl
from jax.experimental.pallas import tpu as pltpu


# ----------------------------- kernels ---------------------------------------


def _act(x, name="identity", slope=1.0):
    if name == "identity":
        return x
    if name == "tanh":
        return jnp.tanh(x)
    if name == "relu":
        return jnp.maximum(x, 0.0)
    if name == "leaky_relu":
        return jnp.where(x >= 0, x, slope * x)
    raise ValueError(name)


def _identity_kernel(x_ref, w_ref, o_ref):
    # identity activation: whole model is a single matvec  z = X @ w_eff
    o_ref[...] = jnp.dot(x_ref[...], w_ref[...],
                         preferred_element_type=jnp.float32)


def _general_kernel(x_ref, u_ref, w_ref, t_ref, o_ref, *, act_name, slope):
    x = x_ref[...]                                                     # (TB, d)
    # feature branch (fully folded): (TB,d)@(d,1)
    feat = jnp.dot(x, u_ref[...], preferred_element_type=jnp.float32)  # (TB, 1)
    # meta branch: scales already folded into W_eff / t_eff
    s = jnp.dot(x, w_ref[...], preferred_element_type=jnp.float32)     # (TB, HHp)
    s = _act(s, act_name, slope)
    meta = jnp.dot(s, t_ref[...], preferred_element_type=jnp.float32)  # (TB, 1)
    o_ref[...] = feat + meta


# ----------------------------- wrapper ----------------------------------------


def quadratic_with_bias_forward(x, U, W, proj_feat, proj_meta,
                                theta_student_feat, theta_student_meta,
                                zeta_student, act_name="identity", slope=1.0,
                                block_b=512):
    """Student-branch forward of quadratic_with_bias. Returns shape (B,)."""
    x = x.reshape(x.shape[0], -1).astype(jnp.float32)        # nn.Flatten
    B, d = x.shape
    F = U.shape[1]
    H = W.shape[1]

    feat_scale = (d ** -0.5) * (F ** -0.5)
    meta_pre_scale = d ** -0.5
    meta_post_scale = 0.5 * float(zeta_student)

    # ---- fold linear contractions into the weights (exact) ----
    f_vec = proj_feat @ theta_student_feat                    # (F,)
    u_eff = (feat_scale * (U @ f_vec)).reshape(d, 1)          # (d, 1)

    t = proj_meta @ theta_student_meta                        # (H,)
    t_outer = (meta_post_scale * jnp.outer(t, t)).reshape(H * H)
    W_flat = (meta_pre_scale * W).reshape(d, H * H)           # pre-scale folded in

    # ---- pad lane dim (H*H) up to a multiple of 128 (zero cols are exact) ----
    HH = H * H
    HHp = max(128, ((HH + 127) // 128) * 128)
    if HHp != HH:
        W_eff = jnp.zeros((d, HHp), jnp.float32).at[:, :HH].set(W_flat)
        t_eff = jnp.zeros((HHp, 1), jnp.float32).at[:HH, 0].set(t_outer)
    else:
        W_eff = W_flat
        t_eff = t_outer.reshape(HH, 1)

    # ---- batch tiling (TB multiple of 8; pad B with zero rows) ----
    B8 = ((B + 7) // 8) * 8
    TB = min(int(block_b), B8)
    TB = ((TB + 7) // 8) * 8
    B_pad = ((B + TB - 1) // TB) * TB
    if B_pad != B:
        x_p = jnp.zeros((B_pad, d), jnp.float32).at[:B].set(x)
    else:
        x_p = x
    n_tiles = B_pad // TB

    cparams = pltpu.CompilerParams(
        dimension_semantics=("parallel",),
        vmem_limit_bytes=32 * 1024 * 1024,
    )

    if act_name == "identity":
        # whole model collapses to one matvec
        w_eff = u_eff + W_eff @ t_eff                          # (d, 1)
        cost = pl.CostEstimate(
            flops=2 * B_pad * d,
            transcendentals=0,
            bytes_accessed=4 * (B_pad * d + d + B_pad))
        out = pl.pallas_call(
            _identity_kernel,
            out_shape=jax.ShapeDtypeStruct((B_pad, 1), jnp.float32),
            grid=(n_tiles,),
            in_specs=[pl.BlockSpec((TB, d), lambda i: (i, 0)),
                      pl.BlockSpec((d, 1), lambda i: (0, 0))],
            out_specs=pl.BlockSpec((TB, 1), lambda i: (i, 0)),
            compiler_params=cparams,
            cost_estimate=cost,
        )(x_p, w_eff)
    else:
        kernel = functools.partial(_general_kernel,
                                   act_name=act_name, slope=float(slope))
        transc = B_pad * HHp if act_name == "tanh" else 0
        cost = pl.CostEstimate(
            flops=2 * B_pad * d * (HHp + 1) + 2 * B_pad * HHp,
            transcendentals=transc,
            bytes_accessed=4 * (B_pad * d + d * (HHp + 1) + HHp + B_pad))
        out = pl.pallas_call(
            kernel,
            out_shape=jax.ShapeDtypeStruct((B_pad, 1), jnp.float32),
            grid=(n_tiles,),
            in_specs=[pl.BlockSpec((TB, d), lambda i: (i, 0)),      # streamed X tile
                      pl.BlockSpec((d, 1), lambda i: (0, 0)),       # resident u_eff
                      pl.BlockSpec((d, HHp), lambda i: (0, 0)),     # resident W_eff
                      pl.BlockSpec((HHp, 1), lambda i: (0, 0))],    # resident t_eff
            out_specs=pl.BlockSpec((TB, 1), lambda i: (i, 0)),
            compiler_params=cparams,
            cost_estimate=cost,
        )(x_p, u_eff, W_eff, t_eff)

    return out[:B, 0]


# ----------- deterministic parameter construction (mirrors __init__) ----------


def generate_matrix(key, input_dim, hidden_dim):
    """W tensor: matrix_dist = normal(0,1), eval_dist = uniform(1,1)."""
    assert hidden_dim % 2 == 0
    kb, = jax.random.split(key, 1)
    b = jax.random.normal(kb, (input_dim, hidden_dim, hidden_dim), dtype=jnp.float32)
    a = (2.0 ** -0.5) * (b - jnp.swapaxes(b, 1, 2))             # skew-symmetric
    evecs = jax.vmap(jax.scipy.linalg.expm)(a)                  # orthogonal (d,H,H)
    evals_pos = jnp.ones((input_dim, hidden_dim // 2), jnp.float32)   # U(1,1) == 1
    evals = jnp.concatenate([evals_pos, -evals_pos], axis=1)
    return jnp.einsum("ia,iam,ian->imn", evals, evecs, evecs)


def make_permutation_proj(key, dim, masked):
    kept = dim - masked
    idx = jax.random.permutation(key, dim)[:kept]
    proj = jnp.zeros((dim, kept), jnp.float32)
    return proj.at[idx, jnp.arange(kept)].set(1.0)


def reference_forward(x, U, W, proj_feat, proj_meta, theta_feat, theta_meta,
                      input_dim, feat_dim, zeta_student, act_name="identity",
                      slope=1.0):
    """Pure-JAX mirror of the PyTorch student forward."""
    feat = jnp.einsum("bi,im->bm", x, U) * (input_dim ** -0.5) * (feat_dim ** -0.5)
    feat = jnp.einsum("bM,Mn->bn", feat, proj_feat)
    meta = jnp.einsum("bi,imn->bmn", x, W) * (input_dim ** -0.5)
    meta = _act(meta, act_name, slope)
    meta = jnp.einsum("Nr,bNP,Pq->brq", proj_meta, meta, proj_meta)
    feat_out = jnp.einsum("bm,m->b", feat, theta_feat)
    meta_out = jnp.einsum("bmn,m,n->b", meta, theta_meta, theta_meta) * 0.5 * zeta_student
    return feat_out + meta_out


if __name__ == "__main__":
    # Small shapes consistent with the module (input_dim=4, feat_dim=16, meta_dim=8).
    B, input_dim, feat_dim, meta_dim = 300, 4, 16, 8
    masked_feats, masks_metafeats = 0, 0

    key = jax.random.PRNGKey(0)
    k_x, k_u, k_w, k_pf, k_pm, k_tf, k_tm = jax.random.split(key, 7)

    x = jax.random.normal(k_x, (B, input_dim), dtype=jnp.float32)

    # LinearFeature params
    U = jax.random.normal(k_u, (input_dim, feat_dim), dtype=jnp.float32)
    proj_feat = make_permutation_proj(k_pf, feat_dim, masked_feats)

    # MetaFeature params
    W = generate_matrix(k_w, input_dim, meta_dim)                 # (d, H, H)
    proj_meta = make_permutation_proj(k_pm, meta_dim, masks_metafeats)

    # student weights
    theta_student_feat = jax.random.normal(k_tf, (feat_dim - masked_feats,), jnp.float32)
    theta_student_meta = jax.random.normal(k_tm, (meta_dim - masks_metafeats,), jnp.float32)
    zeta_student = (0.5 * (meta_dim - masks_metafeats)) ** (-0.5)

    # Exercise both kernel paths (identity-collapsed matvec, and general act kernel),
    # with TB=128 so the batch grid, zero-row padding and resident weights are all used.
    for act_name, slope in (("identity", 1.0), ("tanh", 1.0), ("leaky_relu", 0.1)):
        out = quadratic_with_bias_forward(
            x, U, W, proj_feat, proj_meta,
            theta_student_feat, theta_student_meta, zeta_student,
            act_name=act_name, slope=slope, block_b=128)
        out = jax.block_until_ready(out)

        ref = reference_forward(x, U, W, proj_feat, proj_meta,
                                theta_student_feat, theta_student_meta,
                                input_dim, feat_dim, zeta_student, act_name, slope)
        assert out.shape == (B,)
        assert jnp.allclose(out, ref, atol=1e-4, rtol=1e-4), (act_name, out, ref)

    print("KERNEL_OK")
</pallas_src>

<mosaic_0001>
module attributes {stable_mosaic.version = 11 : i64} {
  func.func @_identity_kernel(%arg0: i32, %arg1: memref<128x4xf32, #tpu.memory_space<vmem>>, %arg2: memref<4x1xf32, #tpu.memory_space<vmem>>, %arg3: memref<128x1xf32, #tpu.memory_space<vmem>>) attributes {dimension_semantics = [#tpu.dimension_semantics<parallel>], iteration_bounds = array<i64: 3>, scalar_prefetch = 0 : i64, scratch_operands = 0 : i64, tpu.core_type = #tpu.core_type<tc>, window_params = [{transform_indices = @transform_0, window_bounds = array<i64: 128, 4>}, {pipeline_mode = #tpu.pipeline_mode<synchronous>, transform_indices = @transform_1, window_bounds = array<i64: 4, 1>}, {transform_indices = @transform_2, window_bounds = array<i64: 128, 1>}]} {
    %c0 = arith.constant 0 : index
    %c0_0 = arith.constant 0 : index
    %0 = vector.load %arg1[%c0, %c0_0] : memref<128x4xf32, #tpu.memory_space<vmem>>, vector<128x4xf32>
    %c0_1 = arith.constant 0 : index
    %c0_2 = arith.constant 0 : index
    %1 = vector.load %arg2[%c0_1, %c0_2] : memref<4x1xf32, #tpu.memory_space<vmem>>, vector<4x1xf32>
    %cst = arith.constant dense<0.000000e+00> : vector<128x1xf32>
    %2 = tpu.matmul %0, %1, %cst {dimension_numbers = #tpu.dot_dimension_numbers<[1], [0], [0], [1], [0, 0, 1, 1], [], []>} : vector<128x4xf32>, vector<4x1xf32>, vector<128x1xf32> -> vector<128x1xf32>
    %c0_3 = arith.constant 0 : index
    %c0_4 = arith.constant 0 : index
    %3 = vector.load %arg3[%c0_3, %c0_4] : memref<128x1xf32, #tpu.memory_space<vmem>>, vector<128x1xf32>
    tpu.vector_store %arg3[%c0_3, %c0_4], %2 {strides = array<i32>} : memref<128x1xf32, #tpu.memory_space<vmem>>, vector<128x1xf32>,
    return
  }
  func.func @transform_0(%arg0: i32) -> (i32, i32) {
    %c0_i32 = arith.constant 0 : i32
    %c0_i32_0 = arith.constant 0 : i32
    return %arg0, %c0_i32 : i32, i32
  }
  func.func @transform_1(%arg0: i32) -> (i32, i32) {
    %c0_i32 = arith.constant 0 : i32
    %c0_i32_0 = arith.constant 0 : i32
    %c0_i32_1 = arith.constant 0 : i32
    return %c0_i32, %c0_i32_0 : i32, i32
  }
  func.func @transform_2(%arg0: i32) -> (i32, i32) {
    %c0_i32 = arith.constant 0 : i32
    %c0_i32_0 = arith.constant 0 : i32
    return %arg0, %c0_i32 : i32, i32
  }
}

</mosaic_0001>

<llo_original>
// kernel: tpu_custom_call.1
$region0: #{tpu_custom_call.1}
  #allocation0 [shape = 'u32[]', space=smem, size = 0x4, offset = 0x4, fixed_abs, tag = 'smem constant byte address 0x4 - core index']
  #allocation1 [shape = 'u32[144,128]{1,0:T(1,128)}', space=vmem, size = 0x12000, scoped, tag = 'internal scratch']
  %s0 = inlined_call_operand.vmem [shape: f32[384,4], index: 0, kind: input, shape index: {}]
  %s1 = inlined_call_operand.vmem [shape: f32[4,1], index: 1, kind: input, shape index: {}]
  %s2 = inlined_call_operand.vmem [shape: f32[384,1], index: 2, kind: output, shape index: {}]
  %s3 = sld [smem:[#allocation0]]
  $region41: #{tpu_custom_call.1} parent=0
    _
  %s5 = ssub.s32 1, %s3
  %s6 = scalar_select 0, %s5, %s3
  loop: start=0, step=1, limit=5
  $region2: #{tpu_custom_call.1} parent=0 // loop_pre_header
    _
  $region3: #{tpu_custom_call.1} parent=0 // loop_header
    %s8 = sphi 0, %s12
    %p9 = scmp.ge.s32.totalorder %s8, 5
    %s18 = sphi 0, %s20
    %s21 = sphi 0, %s18
    %s22 = sphi 0, %s21
    %s38 = sphi 0, %s22
    %s42 = sphi 0, %s42
    %s44 = sphi 0, %s42
    %s45 = sphi 0, %s44
    %s59 = sphi 0, %s45
    %s65 = sphi 0, %s67
    %s68 = sphi 0, %s65
    %s69 = sphi 0, %s68
    %s85 = sphi 0, %s69
  $region4: #{tpu_custom_call.1} parent=0 // loop_header_branch
    %11 = sbr.rel (%p9) target = $region8
  $region5: #{tpu_custom_call.1} parent=0 // loop_body
    %s13 = ssub.s32 %s8, 1
    %s14 = ssub.s32 %s8, 2
    %s15 = sadd.s32 %s8, 1
    %s16 = ssub.s32 %s8, %s15
    %p17 = scmp.eq.s32.totalorder %s16, 0
    %s19 = sadd.s32 %s18, 1
    %s20 = scalar_select %p17, %s18, %s19
    %p23 = pneg %p17
    %p24 = scmp.eq.s32.totalorder %s8, 2
    %p25 = por %p23, %p24
    %p26 = scmp.ne.s32.totalorder %s18, %s21
    %p27 = scmp.eq.s32.totalorder %s8, 0
    %p28 = por %p26, %p27
    %p29 = scmp.ne.s32.totalorder %s18, %s21
    %p30 = scmp.eq.s32.totalorder %s13, 2
    %p31 = por %p29, %p30
    %p32 = scmp.ne.s32.totalorder %s21, %s22
    %p33 = scmp.eq.s32.totalorder %s13, 0
    %p34 = por %p32, %p33
    %p35 = scmp.ne.s32.totalorder %s21, %s22
    %p36 = scmp.eq.s32.totalorder %s14, 2
    %p37 = por %p35, %p36
    %p39 = scmp.ne.s32.totalorder %s22, %s38
    %p40 = scmp.eq.s32.totalorder %s14, 0
    %p41 = por %p39, %p40
    %s43 = sadd.s32 %s42, 1
    %p46 = scmp.eq.s32.totalorder %s8, 2
    %p47 = scmp.ne.s32.totalorder %s42, %s44
    %p48 = scmp.eq.s32.totalorder %s8, 0
    %p49 = por %p47, %p48
    %p50 = scmp.ne.s32.totalorder %s42, %s44
    %p51 = scmp.eq.s32.totalorder %s13, 2
    %p52 = por %p50, %p51
    %p53 = scmp.ne.s32.totalorder %s44, %s45
    %p54 = scmp.eq.s32.totalorder %s13, 0
    %p55 = por %p53, %p54
    %p56 = scmp.ne.s32.totalorder %s44, %s45
    %p57 = scmp.eq.s32.totalorder %s14, 2
    %p58 = por %p56, %p57
    %p60 = scmp.ne.s32.totalorder %s45, %s59
    %p61 = scmp.eq.s32.totalorder %s14, 0
    %p62 = por %p60, %p61
    %s63 = ssub.s32 %s8, %s15
    %p64 = scmp.eq.s32.totalorder %s63, 0
    %s66 = sadd.s32 %s65, 1
    %s67 = scalar_select %p64, %s65, %s66
    %p70 = pneg %p64
    %p71 = scmp.eq.s32.totalorder %s8, 2
    %p72 = por %p70, %p71
    %p73 = scmp.ne.s32.totalorder %s65, %s68
    %p74 = scmp.eq.s32.totalorder %s8, 0
    %p75 = por %p73, %p74
    %p76 = scmp.ne.s32.totalorder %s65, %s68
    %p77 = scmp.eq.s32.totalorder %s13, 2
    %p78 = por %p76, %p77
    %p79 = scmp.ne.s32.totalorder %s68, %s69
    %p80 = scmp.eq.s32.totalorder %s13, 0
    %p81 = por %p79, %p80
    %p82 = scmp.ne.s32.totalorder %s68, %s69
    %p83 = scmp.eq.s32.totalorder %s14, 2
    %p84 = por %p82, %p83
    %p86 = scmp.ne.s32.totalorder %s69, %s85
    %p87 = scmp.eq.s32.totalorder %s14, 0
    %p88 = por %p86, %p87
    %p89 = scmp.le.s32.totalorder 1, %s8
    %p90 = scmp.lt.s32.totalorder %s8, 4
    %p91 = pnand %p89, %p90
    %p92 = pneg %p91
    // Predicated region
    $region9: #{tpu_custom_call.1} parent=5 // pred_check
      _
    $region10: #{tpu_custom_call.1} parent=5 // pred_check_branch
      %94 = sbr.rel (%p91) target = $region12
    $region11: #{tpu_custom_call.1} parent=5 // pred_region
      %s95 = ssub.s32 %s8, 1
      // Predicated region
      $region13: #{tpu_custom_call.1} parent=11 // pred_check
        %p96 = pneg %p55
      $region14: #{tpu_custom_call.1} parent=11 // pred_check_branch
        %98 = sbr.rel (%p96) target = $region16
      $region15: #{tpu_custom_call.1} parent=11 // pred_region
        _
      $region16: #{tpu_custom_call.1} parent=11 // pred_fallthru
        _
    $region12: #{tpu_custom_call.1} parent=5 // pred_fallthru
      _
    %p99 = scmp.lt.s32.totalorder %s8, 3
    // Predicated region
    $region17: #{tpu_custom_call.1} parent=5 // pred_check
      %p100 = pneg %p99
    $region18: #{tpu_custom_call.1} parent=5 // pred_check_branch
      %102 = sbr.rel (%p100) target = $region20
    $region19: #{tpu_custom_call.1} parent=5 // pred_region
      // Predicated region
      $region21: #{tpu_custom_call.1} parent=19 // pred_check
        %p103 = pneg %p28
      $region22: #{tpu_custom_call.1} parent=19 // pred_check_branch
        %105 = sbr.rel (%p103) target = $region24
      $region23: #{tpu_custom_call.1} parent=19 // pred_region
        %s106 = smul.u32 16, %s8
        %p107 = scmp.lt.s32.totalorder %s106, 47
        %s108 = scalar_select %p107, %s106, 47
        %s109 = smul.addr %s108, 8
        %s110 = scalar_lea.vmem %s0, %s109
        %s111 = smul.u32 16, %s8
      $region24: #{tpu_custom_call.1} parent=19 // pred_fallthru
        _
    $region20: #{tpu_custom_call.1} parent=5 // pred_fallthru
      _
    %p112 = scmp.le.s32.totalorder 1, %s8
    %p113 = scmp.lt.s32.totalorder %s8, 4
    %p114 = pnand %p112, %p113
    %p115 = pneg %p114
    // Predicated region
    $region25: #{tpu_custom_call.1} parent=5 // pred_check
      _
    $region26: #{tpu_custom_call.1} parent=5 // pred_check_branch
      %117 = sbr.rel (%p114) target = $region28
    $region27: #{tpu_custom_call.1} parent=5 // pred_region
      %s118 = ssub.s32 %s8, 1
      %s119 = smul.u32 16, %s13
      %p120 = scmp.lt.s32.totalorder %s119, 47
      %s121 = scalar_select %p120, %s119, 47
      %s122 = smul.addr %s121, 8
      %s123 = scalar_lea.vmem %s0, %s122
      %p124 = pneg %p34
      %p125 = pneg %p31
      %p126 = pneg %p55
      %p127 = pneg %p52
      %p128 = pneg %p81
      %p129 = pneg %p78
      %s130 = smul.u32 16, %s13
      %p131 = scmp.lt.s32.totalorder %s130, 47
      %s132 = scalar_select %p131, %s130, 47
      %s133 = smul.addr %s132, 8
      %s134 = scalar_lea.vmem %s2, %s133
      %s135 = smul.u32 16, %s13
      %p136 = scmp.lt.s32.totalorder %s135, 47
      %s137 = scalar_select %p136, %s135, 47
      %s138 = smul.addr %s137, 8
      %s139 = scalar_lea.vmem %s0, %s138
      %s140 = smul.u32 16, %s13
      %s141 = smul.u32 16, %s13
      %p142 = scmp.lt.s32.totalorder %s141, 47
      %s143 = scalar_select %p142, %s141, 47
      %s144 = smul.addr %s143, 8
      %s145 = scalar_lea.vmem %s2, %s144
      %s146 = smul.u32 16, %s13
      %v147 = vld [vmem:[%s139] sm:$0xff]
      %v148 = vld [vmem:[%s139 + $0x8] sm:$0xff]
      %v149 = vld [vmem:[%s139 + $0x10] sm:$0xff]
      %v150 = vld [vmem:[%s139 + $0x18] sm:$0xff]
      %v151 = vld [vmem:[%s139 + $0x20] sm:$0xff]
      %v152 = vld [vmem:[%s139 + $0x28] sm:$0xff]
      %v153 = vld [vmem:[%s139 + $0x30] sm:$0xff]
      %v154 = vld [vmem:[%s139 + $0x38] sm:$0xff]
      %v155 = vld [vmem:[%s139 + $0x40] sm:$0xff]
      %v156 = vld [vmem:[%s139 + $0x48] sm:$0xff]
      %v157 = vld [vmem:[%s139 + $0x50] sm:$0xff]
      %v158 = vld [vmem:[%s139 + $0x58] sm:$0xff]
      %v159 = vld [vmem:[%s139 + $0x60] sm:$0xff]
      %v160 = vld [vmem:[%s139 + $0x68] sm:$0xff]
      %v161 = vld [vmem:[%s139 + $0x70] sm:$0xff]
      %v162 = vld [vmem:[%s139 + $0x78] sm:$0xff]
      %v163 = vld [vmem:[%s1] sm:$0xf]
      %vm164 = vcmask 31744
      %v166 = vsel %vm164, %v147, 0
      %v169 = vsel %vm164, %v148, 0
      %v172 = vsel %vm164, %v149, 0
      %v175 = vsel %vm164, %v150, 0
      %v178 = vsel %vm164, %v151, 0
      %v181 = vsel %vm164, %v152, 0
      %v184 = vsel %vm164, %v153, 0
      %v187 = vsel %vm164, %v154, 0
      %v190 = vsel %vm164, %v155, 0
      %v193 = vsel %vm164, %v156, 0
      %v196 = vsel %vm164, %v157, 0
      %v199 = vsel %vm164, %v158, 0
      %v202 = vsel %vm164, %v159, 0
      %v205 = vsel %vm164, %v160, 0
      %v208 = vsel %vm164, %v161, 0
      %v211 = vsel %vm164, %v162, 0
      %vm213 = vcmask 1043456
      %v215 = vsel %vm213, %v163, 0
      %217 = vmatprep.subr.mxu0 0.0
      %218 = vmatpush1.msra.mxu0 %v215
      %219 = vmatprep.subr.mxu0 0.0
      %220 = vmatpush1.msra.mxu0 0.0
      %221 = vmatprep.subr.mxu0 0.0
      %222 = vmatpush1.msra.mxu0 0.0
      %223 = vmatprep.subr.mxu0 0.0
      %224 = vmatpush1.msra.mxu0 0.0
      %225 = vmatprep.subr.mxu0 0.0
      %226 = vmatpush1.msra.mxu0 0.0
      %227 = vmatprep.subr.mxu0 0.0
      %228 = vmatpush1.msra.mxu0 0.0
      %229 = vmatprep.subr.mxu0 0.0
      %230 = vmatpush1.msra.mxu0 0.0
      %231 = vmatprep.subr.mxu0 0.0
      %232 = vmatpush1.msra.mxu0 0.0
      %233 = vmatprep.subr.mxu0 0.0
      %234 = vmatpush1.msra.mxu0 0.0
      %235 = vmatprep.subr.mxu0 0.0
      %236 = vmatpush1.msra.mxu0 0.0
      %237 = vmatprep.subr.mxu0 0.0
      %238 = vmatpush1.msra.mxu0 0.0
      %239 = vmatprep.subr.mxu0 0.0
      %240 = vmatpush1.msra.mxu0 0.0
      %241 = vmatprep.subr.mxu0 0.0
      %242 = vmatpush1.msra.mxu0 0.0
      %243 = vmatprep.subr.mxu0 0.0
      %244 = vmatpush1.msra.mxu0 0.0
      %245 = vmatprep.subr.mxu0 0.0
      %246 = vmatpush1.msra.mxu0 0.0
      %247 = vmatprep.subr.mxu0 0.0
      %248 = vmatpush1.msra.mxu0 0.0
      %249 = vmatprep.subr.mxu0 0.0
      %250 = vmatpush1.msra.mxu0 0.0
      %251 = vmatprep.subr.mxu0 0.0
      %252 = vmatpush1.msra.mxu0 0.0
      %253 = vmatprep.subr.mxu0 0.0
      %254 = vmatpush1.msra.mxu0 0.0
      %255 = vmatprep.subr.mxu0 0.0
      %256 = vmatpush1.msra.mxu0 0.0
      %257 = vmatprep.subr.mxu0 0.0
      %258 = vmatpush1.msra.mxu0 0.0
      %259 = vmatprep.subr.mxu0 0.0
      %260 = vmatpush1.msra.mxu0 0.0
      %261 = vmatprep.subr.mxu0 0.0
      %262 = vmatpush1.msra.mxu0 0.0
      %263 = vmatprep.subr.mxu0 0.0
      %264 = vmatpush1.msra.mxu0 0.0
      %265 = vmatprep.subr.mxu0 0.0
      %266 = vmatpush1.msra.mxu0 0.0
      %267 = vmatprep.subr.mxu0 0.0
      %268 = vmatpush1.msra.mxu0 0.0
      %269 = vmatprep.subr.mxu0 0.0
      %270 = vmatpush1.msra.mxu0 0.0
      %271 = vmatprep.subr.mxu0 0.0
      %272 = vmatpush1.msra.mxu0 0.0
      %273 = vmatprep.subr.mxu0 0.0
      %274 = vmatpush1.msra.mxu0 0.0
      %275 = vmatprep.subr.mxu0 0.0
      %276 = vmatpush1.msra.mxu0 0.0
      %277 = vmatprep.subr.mxu0 0.0
      %278 = vmatpush1.msra.mxu0 0.0
      %279 = vmatprep.subr.mxu0 0.0
      %280 = vmatpush1.msra.mxu0 0.0
      %281 = vmatprep.mubr.f32.mxu0 0.0
      %282 = vmatmul.mubr.f32.gmra.mrb[0].mxu0 %v166
      %v283 = vpop.f32.mrb[0].mxu0
      %v284 = vadd.f32 0.0, %v283
      %v285 = vpop.f32.mrb[0].mxu0
      %286 = vmatprep.mubr.f32.mxu0 0.0
      %287 = vmatmul.mubr.f32.gmra.mrb[0].mxu0 %v169
      %v288 = vpop.f32.mrb[0].mxu0
      %v289 = vadd.f32 0.0, %v288
      %v290 = vpop.f32.mrb[0].mxu0
      %291 = vmatprep.mubr.f32.mxu0 0.0
      %292 = vmatmul.mubr.f32.gmra.mrb[0].mxu0 %v172
      %v293 = vpop.f32.mrb[0].mxu0
      %v294 = vadd.f32 0.0, %v293
      %v295 = vpop.f32.mrb[0].mxu0
      %296 = vmatprep.mubr.f32.mxu0 0.0
      %297 = vmatmul.mubr.f32.gmra.mrb[0].mxu0 %v175
      %v298 = vpop.f32.mrb[0].mxu0
      %v299 = vadd.f32 0.0, %v298
      %v300 = vpop.f32.mrb[0].mxu0
      %301 = vmatprep.mubr.f32.mxu0 0.0
      %302 = vmatmul.mubr.f32.gmra.mrb[0].mxu0 %v178
      %v303 = vpop.f32.mrb[0].mxu0
      %v304 = vadd.f32 0.0, %v303
      %v305 = vpop.f32.mrb[0].mxu0
      %306 = vmatprep.mubr.f32.mxu0 0.0
      %307 = vmatmul.mubr.f32.gmra.mrb[0].mxu0 %v181
      %v308 = vpop.f32.mrb[0].mxu0
      %v309 = vadd.f32 0.0, %v308
      %v310 = vpop.f32.mrb[0].mxu0
      %311 = vmatprep.mubr.f32.mxu0 0.0
      %312 = vmatmul.mubr.f32.gmra.mrb[0].mxu0 %v184
      %v313 = vpop.f32.mrb[0].mxu0
      %v314 = vadd.f32 0.0, %v313
      %v315 = vpop.f32.mrb[0].mxu0
      %316 = vmatprep.mubr.f32.mxu0 0.0
      %317 = vmatmul.mubr.f32.gmra.mrb[0].mxu0 %v187
      %v318 = vpop.f32.mrb[0].mxu0
      %v319 = vadd.f32 0.0, %v318
      %v320 = vpop.f32.mrb[0].mxu0
      %321 = vmatprep.mubr.f32.mxu0 0.0
      %322 = vmatmul.mubr.f32.gmra.mrb[0].mxu0 %v190
      %v323 = vpop.f32.mrb[0].mxu0
      %v324 = vadd.f32 0.0, %v323
      %v325 = vpop.f32.mrb[0].mxu0
      %326 = vmatprep.mubr.f32.mxu0 0.0
      %327 = vmatmul.mubr.f32.gmra.mrb[0].mxu0 %v193
      %v328 = vpop.f32.mrb[0].mxu0
      %v329 = vadd.f32 0.0, %v328
      %v330 = vpop.f32.mrb[0].mxu0
      %331 = vmatprep.mubr.f32.mxu0 0.0
      %332 = vmatmul.mubr.f32.gmra.mrb[0].mxu0 %v196
      %v333 = vpop.f32.mrb[0].mxu0
      %v334 = vadd.f32 0.0, %v333
      %v335 = vpop.f32.mrb[0].mxu0
      %336 = vmatprep.mubr.f32.mxu0 0.0
      %337 = vmatmul.mubr.f32.gmra.mrb[0].mxu0 %v199
      %v338 = vpop.f32.mrb[0].mxu0
      %v339 = vadd.f32 0.0, %v338
      %v340 = vpop.f32.mrb[0].mxu0
      %341 = vmatprep.mubr.f32.mxu0 0.0
      %342 = vmatmul.mubr.f32.gmra.mrb[0].mxu0 %v202
      %v343 = vpop.f32.mrb[0].mxu0
      %v344 = vadd.f32 0.0, %v343
      %v345 = vpop.f32.mrb[0].mxu0
      %346 = vmatprep.mubr.f32.mxu0 0.0
      %347 = vmatmul.mubr.f32.gmra.mrb[0].mxu0 %v205
      %v348 = vpop.f32.mrb[0].mxu0
      %v349 = vadd.f32 0.0, %v348
      %v350 = vpop.f32.mrb[0].mxu0
      %351 = vmatprep.mubr.f32.mxu0 0.0
      %352 = vmatmul.mubr.f32.gmra.mrb[0].mxu0 %v208
      %v353 = vpop.f32.mrb[0].mxu0
      %v354 = vadd.f32 0.0, %v353
      %v355 = vpop.f32.mrb[0].mxu0
      %356 = vmatprep.mubr.f32.mxu0 0.0
      %357 = vmatmul.mubr.f32.gmra.mrb[0].mxu0 %v211
      %v358 = vpop.f32.mrb[0].mxu0
      %v359 = vadd.f32 0.0, %v358
      %v360 = vpop.f32.mrb[0].mxu0
      %361 = vdwg.mxu0
      %vm362 = vcmask 7168
      %363 = vst.msk [vmem:[%s145] sm:$0xff] %vm362, %v284
      %364 = vst.msk [vmem:[%s145 + $0x8] sm:$0xff] %vm362, %v289
      %365 = vst.msk [vmem:[%s145 + $0x10] sm:$0xff] %vm362, %v294
      %366 = vst.msk [vmem:[%s145 + $0x18] sm:$0xff] %vm362, %v299
      %367 = vst.msk [vmem:[%s145 + $0x20] sm:$0xff] %vm362, %v304
      %368 = vst.msk [vmem:[%s145 + $0x28] sm:$0xff] %vm362, %v309
      %369 = vst.msk [vmem:[%s145 + $0x30] sm:$0xff] %vm362, %v314
      %370 = vst.msk [vmem:[%s145 + $0x38] sm:$0xff] %vm362, %v319
      %371 = vst.msk [vmem:[%s145 + $0x40] sm:$0xff] %vm362, %v324
      %372 = vst.msk [vmem:[%s145 + $0x48] sm:$0xff] %vm362, %v329
      %373 = vst.msk [vmem:[%s145 + $0x50] sm:$0xff] %vm362, %v334
      %374 = vst.msk [vmem:[%s145 + $0x58] sm:$0xff] %vm362, %v339
      %375 = vst.msk [vmem:[%s145 + $0x60] sm:$0xff] %vm362, %v344
      %376 = vst.msk [vmem:[%s145 + $0x68] sm:$0xff] %vm362, %v349
      %377 = vst.msk [vmem:[%s145 + $0x70] sm:$0xff] %vm362, %v354
      %378 = vst.msk [vmem:[%s145 + $0x78] sm:$0xff] %vm362, %v359
      %s379 = smul.u32 16, %s13
      %p380 = scmp.lt.s32.totalorder %s379, 47
      %s381 = scalar_select %p380, %s379, 47
      %s382 = smul.addr %s381, 8
      %s383 = scalar_lea.vmem %s2, %s382
      // Predicated region
      $region29: #{tpu_custom_call.1} parent=27 // pred_check
        %p384 = pneg %p78
      $region30: #{tpu_custom_call.1} parent=27 // pred_check_branch
        %386 = sbr.rel (%p384) target = $region32
      $region31: #{tpu_custom_call.1} parent=27 // pred_region
        %s387 = smul.u32 16, %s13
      $region32: #{tpu_custom_call.1} parent=27 // pred_fallthru
        _
    $region28: #{tpu_custom_call.1} parent=5 // pred_fallthru
      _
    %p388 = scmp.le.s32.totalorder 2, %s8
    // Predicated region
    $region33: #{tpu_custom_call.1} parent=5 // pred_check
      %p389 = pneg %p388
    $region34: #{tpu_custom_call.1} parent=5 // pred_check_branch
      %391 = sbr.rel (%p389) target = $region36
    $region35: #{tpu_custom_call.1} parent=5 // pred_region
      %s392 = ssub.s32 %s8, 2
      // Predicated region
      $region37: #{tpu_custom_call.1} parent=35 // pred_check
        %p393 = pneg %p84
      $region38: #{tpu_custom_call.1} parent=35 // pred_check_branch
        %395 = sbr.rel (%p393) target = $region40
      $region39: #{tpu_custom_call.1} parent=35 // pred_region
        %s396 = smul.u32 16, %s14
        %p397 = scmp.lt.s32.totalorder %s396, 47
        %s398 = scalar_select %p397, %s396, 47
        %s399 = smul.addr %s398, 8
        %s400 = scalar_lea.vmem %s2, %s399
      $region40: #{tpu_custom_call.1} parent=35 // pred_fallthru
        _
    $region36: #{tpu_custom_call.1} parent=5 // pred_fallthru
      _
  $region6: #{tpu_custom_call.1} parent=0 // loop_footer
    %s12 = sadd.s32 1, %s8
  $region7: #{tpu_custom_call.1} parent=0 // loop_footer_branch
    %7 = sbr.rel target = $region3
  $region8: #{tpu_custom_call.1} parent=0 // loop_exit
    _

</llo_original>
